<compile_context>
chip_gen: v5e
topology: v5e:2x2
jax: 0.10.0
libtpu: 0.0.40
codegen_flags: <defaults>
</compile_context>

<pallas_src>
import functools
import math

import jax
import jax.numpy as jnp
from jax.experimental import pallas as pl
from jax.experimental.pallas import tpu as pltpu


# ---------------------------------------------------------------------------
# Pallas kernel: TB batch elements of the spatial-attention-memory update
# ---------------------------------------------------------------------------
def _sam_kernel(x_ref, m_ref, wt_ref, bias_ref, addmask_ref, mask_ref,
                newmem_ref, sim_ref, *, alpha):
    tb, n_cutout, feat = x_ref.shape      # (TB, n_cutout, F)
    embed_len = wt_ref.shape[-1]          # E
    rows = tb * n_cutout

    x3 = x_ref[...]                       # (TB, n_cutout, F) f32
    m3 = m_ref[...]                       # (TB, n_cutout, F) f32

    # Single fused MXU push for both the new signal and the memory: stacking
    # along the row (sublane) axis is layout-free and doubles MXU row fill.
    # BatchNorm is already folded into wt/bias on the host, so the embed is
    # just matmul + bias + LeakyReLU.
    xm = jnp.concatenate(
        [x3.reshape(rows, feat), m3.reshape(rows, feat)], axis=0)  # (2*rows, F)
    wt = wt_ref[...]                      # (F, E); bf16 optional on v6e/v7x
    e = jnp.dot(xm.astype(wt.dtype), wt,
                preferred_element_type=jnp.float32) + bias_ref[...]
    e = jnp.maximum(e, 0.1 * e)           # LeakyReLU(negative_slope=0.1)
    embed_x = e[:rows].reshape(tb, n_cutout, embed_len)
    embed_m = e[rows:].reshape(tb, n_cutout, embed_len)

    # Batched similarity (contract the embed dim directly; no explicit .T on a
    # 3-D array) followed by the masked softmax.  The mask is applied
    # additively (host-precomputed -1e10*(1-mask), which only steers the max)
    # and multiplicatively, matching the PyTorch module bit-for-bit in spirit.
    sim = jnp.einsum('bqe,bke->bqk', embed_x, embed_m,
                     preferred_element_type=jnp.float32)   # (TB, nc, nc)
    sim = sim + addmask_ref[...]
    max_sim = jnp.max(sim, axis=-1, keepdims=True)          # XLU reduce
    exp_sim = jnp.exp(sim - max_sim) * mask_ref[...]        # EUP exp
    exps_sum = jnp.sum(exp_sim, axis=-1, keepdims=True)
    sim = exp_sim * pl.reciprocal(exps_sum, approx=True)    # EUP, frees VALU

    # Attention-weighted memory + exponential-moving-average blend, rewritten
    # as x + (1 - alpha) * (w - x) == alpha*x + (1-alpha)*w to save one
    # full-tile multiply.
    atten_w = jnp.einsum('bqk,bkf->bqf', sim, m3,
                         preferred_element_type=jnp.float32)  # (TB, nc, F)
    newmem_ref[...] = x3 + (1.0 - alpha) * (atten_w - x3)
    sim_ref[...] = sim
    # TODO(synk): outputs keep last dims F=32 / n_cutout=16 (lane-sparse vst);
    # packing them into a >=128-lane slab needs an in-kernel sublane->lane
    # relayout, skipped here for lowering safety at these shapes.


def _choose_block_batches(n_batch, n_cutout, feat):
    """How many batch elements to fold into one grid step.

    Targets ~2 MiB of per-step input (amortizes the ~0.35us grid-step overhead
    and fills MXU rows) while keeping >= 2 grid steps so the parallel batch
    axis can still be sharded across TensorCores (v7x megacore) and requiring
    TB to divide n_batch (keeps BlockSpecs exact, no ragged tail).
    """
    per_batch_bytes = 2 * n_cutout * feat * 4     # x block + m block (f32)
    tb = max(1, (2 << 20) // max(per_batch_bytes, 1))
    tb = min(tb, n_batch)
    while tb > 1 and (n_batch % tb != 0 or n_batch // tb < 2):
        tb -= 1
    return tb


def spatial_attention_memory_update(sig_new, atten_mem, w_conv, b_conv,
                                    bn_gamma, bn_beta, bn_mean, bn_var,
                                    nb_mask, *, alpha, bn_eps=1e-5,
                                    matmul_dtype=jnp.float32):
    """One forward step (the `atten_mem is not None` branch).

    sig_new, atten_mem : (B, n_cutout, C, P) float32
    Returns (new_atten_mem (B, n_cutout, C, P), sim_score (B, n_cutout, n_cutout)).

    `matmul_dtype=jnp.bfloat16` can be passed on v6e/v7x to hit the native
    bf16 MXU path; the default float32 keeps exact parity with the module.
    """
    B, n_cutout, C, P = sig_new.shape
    F = C * P
    E = w_conv.shape[0]

    x_flat = sig_new.reshape(B, n_cutout, F).astype(jnp.float32)
    m_flat = atten_mem.reshape(B, n_cutout, F).astype(jnp.float32)

    # Fold eval-mode BatchNorm1d into the conv weight / bias (host glue):
    #   BN(v @ W^T + b) = v @ (W^T * scale) + (b * scale + shift)
    scale = (bn_gamma / jnp.sqrt(bn_var + bn_eps)).astype(jnp.float32)   # (E,)
    shift = (bn_beta - bn_mean * scale).astype(jnp.float32)              # (E,)
    wt_folded = (w_conv.reshape(E, F).T.astype(jnp.float32)
                 * scale[None, :]).astype(matmul_dtype)                  # (F, E)
    bias_folded = (b_conv.astype(jnp.float32) * scale + shift).reshape(1, E)

    mask = nb_mask.astype(jnp.float32)                 # (n_cutout, n_cutout)
    addmask = (-1.0e10) * (1.0 - mask)                 # additive softmax mask

    TB = _choose_block_batches(B, n_cutout, F)
    grid = (B // TB,)

    kernel = functools.partial(_sam_kernel, alpha=float(alpha))

    # Advisory cost hint for the XLA scheduler around the custom call.
    flops = (2 * (2 * B * n_cutout) * F * E          # fused embed matmul
             + 2 * B * n_cutout * n_cutout * E       # similarity
             + 2 * B * n_cutout * n_cutout * F)      # attention-weighted mem
    transcendentals = B * n_cutout * n_cutout + B * n_cutout
    bytes_accessed = 4 * (3 * B * n_cutout * F + B * n_cutout * n_cutout
                          + F * E + E + 2 * n_cutout * n_cutout)
    cost = pl.CostEstimate(flops=flops, transcendentals=transcendentals,
                           bytes_accessed=bytes_accessed)

    new_mem_flat, sim_score = pl.pallas_call(
        kernel,
        out_shape=(
            jax.ShapeDtypeStruct((B, n_cutout, F), jnp.float32),
            jax.ShapeDtypeStruct((B, n_cutout, n_cutout), jnp.float32),
        ),
        grid_spec=pltpu.PrefetchScalarGridSpec(
            num_scalar_prefetch=0,
            grid=grid,
            in_specs=[
                pl.BlockSpec((TB, n_cutout, F), lambda b: (b, 0, 0)),     # sig_new
                pl.BlockSpec((TB, n_cutout, F), lambda b: (b, 0, 0)),     # atten_mem
                pl.BlockSpec((F, E), lambda b: (0, 0)),                   # folded W^T
                pl.BlockSpec((1, E), lambda b: (0, 0)),                   # folded bias
                pl.BlockSpec((n_cutout, n_cutout), lambda b: (0, 0)),     # additive mask
                pl.BlockSpec((n_cutout, n_cutout), lambda b: (0, 0)),     # 0/1 mask
            ],
            out_specs=[
                pl.BlockSpec((TB, n_cutout, F), lambda b: (b, 0, 0)),
                pl.BlockSpec((TB, n_cutout, n_cutout), lambda b: (b, 0, 0)),
            ],
        ),
        compiler_params=pltpu.CompilerParams(
            dimension_semantics=("parallel",)),
        cost_estimate=cost,
    )(x_flat, m_flat, wt_folded, bias_folded, addmask, mask)

    return new_mem_flat.reshape(B, n_cutout, C, P), sim_score


# ---------------------------------------------------------------------------
# Glue: neighbour mask + deterministic parameter init (mirrors __init__)
# ---------------------------------------------------------------------------
def generate_neighbour_mask(n_cutout, win_size, pano_scan, training=False):
    half_ws = int(win_size / 2)
    inds_col = (jnp.arange(n_cutout)[:, None]
                + jnp.arange(-half_ws, half_ws + 1)[None, :])
    if pano_scan and not training:
        inds_col = inds_col % n_cutout
    else:
        inds_col = jnp.clip(inds_col, 0, n_cutout - 1)
    inds_row = jnp.broadcast_to(jnp.arange(n_cutout)[:, None], inds_col.shape)
    mask = jnp.zeros((n_cutout, n_cutout), jnp.float32)
    mask = mask.at[inds_row.reshape(-1), inds_col.reshape(-1)].set(1.0)
    return mask


def init_params(key, n_pts, n_channel, embed_len):
    # Conv1d(n_channel, embed_len, kernel_size=n_pts)
    fan_in = n_channel * n_pts
    gain = math.sqrt(2.0 / (1.0 + 0.1 ** 2))    # kaiming_normal_, a=0.1, leaky_relu
    std = gain / math.sqrt(fan_in)
    k_w, k_b = jax.random.split(key)
    w_conv = std * jax.random.normal(k_w, (embed_len, n_channel, n_pts), jnp.float32)
    bound = 1.0 / math.sqrt(fan_in)             # default Conv1d bias init
    b_conv = jax.random.uniform(k_b, (embed_len,), jnp.float32, -bound, bound)
    # BatchNorm1d(embed_len): weight=1, bias=0, running stats at defaults
    bn_gamma = jnp.ones((embed_len,), jnp.float32)
    bn_beta = jnp.zeros((embed_len,), jnp.float32)
    bn_mean = jnp.zeros((embed_len,), jnp.float32)
    bn_var = jnp.ones((embed_len,), jnp.float32)
    return w_conv, b_conv, bn_gamma, bn_beta, bn_mean, bn_var


# ---------------------------------------------------------------------------
# Pure-JAX reference (mirrors the PyTorch forward, eval-mode BatchNorm)
# ---------------------------------------------------------------------------
def _reference(sig_new, atten_mem, w_conv, b_conv, bn_g, bn_b, bn_m, bn_v,
               nb_mask, alpha, eps=1e-5):
    B, nc, C, P = sig_new.shape
    F = C * P
    E = w_conv.shape[0]
    hi = jax.lax.Precision.HIGHEST

    def conv_bn_lrelu(v):                               # v: (B*nc, C, P)
        out = jnp.dot(v.reshape(-1, F), w_conv.reshape(E, F).T,
                      precision=hi) + b_conv
        out = (out - bn_m) / jnp.sqrt(bn_v + eps) * bn_g + bn_b
        return jnp.where(out >= 0, out, 0.1 * out)

    ex = conv_bn_lrelu(sig_new.reshape(-1, C, P)).reshape(B, nc, E)
    em = conv_bn_lrelu(atten_mem.reshape(-1, C, P)).reshape(B, nc, E)
    sim = jnp.einsum('bqe,bke->bqk', ex, em, precision=hi)
    sim = sim - 1.0e10 * (1.0 - nb_mask)
    mx = sim.max(-1, keepdims=True)
    es = jnp.exp(sim - mx) * nb_mask
    sim = es / es.sum(-1, keepdims=True)
    mem = atten_mem.reshape(B, nc, F)
    w = jnp.einsum('bqk,bkf->bqf', sim, mem, precision=hi)
    new_mem = alpha * sig_new + (1.0 - alpha) * w.reshape(B, nc, C, P)
    return new_mem, sim


# ---------------------------------------------------------------------------
if __name__ == "__main__":
    # module hyper-params
    n_batch, n_cutout, n_channel, n_pts = 2, 16, 4, 8
    embed_len, alpha, win_size, pano_scan = 32, 0.5, 7, True

    key = jax.random.PRNGKey(0)
    k_p, k_s0, k_s1 = jax.random.split(key, 3)

    params = init_params(k_p, n_pts, n_channel, embed_len)
    nb_mask = generate_neighbour_mask(n_cutout, win_size, pano_scan, training=False)

    # First forward call: atten_mem is None -> memory becomes sig0 (no kernel).
    sig0 = jax.random.normal(k_s0, (n_batch, n_cutout, n_channel, n_pts), jnp.float32)
    atten_mem = sig0

    # Second forward call: the interesting path, executed in the Pallas kernel.
    sig1 = jax.random.normal(k_s1, (n_batch, n_cutout, n_channel, n_pts), jnp.float32)
    new_mem, sim_score = spatial_attention_memory_update(
        sig1, atten_mem, *params, nb_mask=nb_mask, alpha=alpha)
    jax.block_until_ready((new_mem, sim_score))

    assert new_mem.shape == (n_batch, n_cutout, n_channel, n_pts)
    assert sim_score.shape == (n_batch, n_cutout, n_cutout)

    # Correctness check against the eval-mode reference (loose tolerance
    # because the kernel uses the approximate EUP reciprocal for the softmax
    # denominator).
    ref_mem, ref_sim = _reference(sig1, atten_mem, *params, nb_mask, alpha)
    jax.block_until_ready((ref_mem, ref_sim))
    assert bool(jnp.allclose(sim_score, ref_sim, rtol=2e-2, atol=2e-2))
    assert bool(jnp.allclose(new_mem, ref_mem, rtol=2e-2, atol=2e-2))
    # softmax rows over the neighbour window must sum to ~1
    assert bool(jnp.allclose(sim_score.sum(-1), 1.0, atol=5e-3))

    print("KERNEL_OK")
</pallas_src>

<mosaic_0001>
module attributes {stable_mosaic.version = 11 : i64} {
  func.func @_sam_kernel(%arg0: i32, %arg1: memref<1x16x32xf32, #tpu.memory_space<vmem>>, %arg2: memref<1x16x32xf32, #tpu.memory_space<vmem>>, %arg3: memref<32x32xf32, #tpu.memory_space<vmem>>, %arg4: memref<1x32xf32, #tpu.memory_space<vmem>>, %arg5: memref<16x16xf32, #tpu.memory_space<vmem>>, %arg6: memref<16x16xf32, #tpu.memory_space<vmem>>, %arg7: memref<1x16x32xf32, #tpu.memory_space<vmem>>, %arg8: memref<1x16x16xf32, #tpu.memory_space<vmem>>) attributes {dimension_semantics = [#tpu.dimension_semantics<parallel>], iteration_bounds = array<i64: 2>, scalar_prefetch = 0 : i64, scratch_operands = 0 : i64, tpu.core_type = #tpu.core_type<tc>, window_params = [{transform_indices = @transform_0, window_bounds = array<i64: 1, 16, 32>}, {transform_indices = @transform_1, window_bounds = array<i64: 1, 16, 32>}, {pipeline_mode = #tpu.pipeline_mode<synchronous>, transform_indices = @transform_2, window_bounds = array<i64: 32, 32>}, {pipeline_mode = #tpu.pipeline_mode<synchronous>, transform_indices = @transform_3, window_bounds = array<i64: 1, 32>}, {pipeline_mode = #tpu.pipeline_mode<synchronous>, transform_indices = @transform_4, window_bounds = array<i64: 16, 16>}, {pipeline_mode = #tpu.pipeline_mode<synchronous>, transform_indices = @transform_5, window_bounds = array<i64: 16, 16>}, {transform_indices = @transform_6, window_bounds = array<i64: 1, 16, 32>}, {transform_indices = @transform_7, window_bounds = array<i64: 1, 16, 16>}]} {
    %c0 = arith.constant 0 : index
    %c0_0 = arith.constant 0 : index
    %c0_1 = arith.constant 0 : index
    %0 = vector.load %arg1[%c0, %c0_0, %c0_1] : memref<1x16x32xf32, #tpu.memory_space<vmem>>, vector<1x16x32xf32>
    %c0_2 = arith.constant 0 : index
    %c0_3 = arith.constant 0 : index
    %c0_4 = arith.constant 0 : index
    %1 = vector.load %arg2[%c0_2, %c0_3, %c0_4] : memref<1x16x32xf32, #tpu.memory_space<vmem>>, vector<1x16x32xf32>
    %2 = vector.shape_cast %0 : vector<1x16x32xf32> to vector<16x32xf32>
    %3 = vector.shape_cast %1 : vector<1x16x32xf32> to vector<16x32xf32>
    %4 = tpu.concatenate %2, %3 in 0 : vector<16x32xf32>, vector<16x32xf32> -> vector<32x32xf32>
    %c0_5 = arith.constant 0 : index
    %c0_6 = arith.constant 0 : index
    %5 = vector.load %arg3[%c0_5, %c0_6] : memref<32x32xf32, #tpu.memory_space<vmem>>, vector<32x32xf32>
    %cst = arith.constant dense<0.000000e+00> : vector<32x32xf32>
    %6 = tpu.matmul %4, %5, %cst {dimension_numbers = #tpu.dot_dimension_numbers<[1], [0], [0], [1], [0, 0, 1, 1], [], []>} : vector<32x32xf32>, vector<32x32xf32>, vector<32x32xf32> -> vector<32x32xf32>
    %c0_7 = arith.constant 0 : index
    %c0_8 = arith.constant 0 : index
    %7 = vector.load %arg4[%c0_7, %c0_8] : memref<1x32xf32, #tpu.memory_space<vmem>>, vector<1x32xf32>
    %8 = vector.broadcast %7 : vector<1x32xf32> to vector<32x32xf32>
    %9 = arith.addf %6, %8 : vector<32x32xf32>
    %cst_9 = arith.constant 1.000000e-01 : f32
    %10 = vector.broadcast %cst_9 : f32 to vector<32x32xf32>
    %11 = arith.mulf %10, %9 : vector<32x32xf32>
    %12 = arith.maximumf %9, %11 : vector<32x32xf32>
    %13 = vector.extract_strided_slice %12 {offsets = [0, 0], sizes = [16, 32], strides = [1, 1]} : vector<32x32xf32> to vector<16x32xf32>
    %14 = vector.shape_cast %13 : vector<16x32xf32> to vector<1x16x32xf32>
    %15 = vector.extract_strided_slice %12 {offsets = [16, 0], sizes = [16, 32], strides = [1, 1]} : vector<32x32xf32> to vector<16x32xf32>
    %16 = vector.shape_cast %15 : vector<16x32xf32> to vector<1x16x32xf32>
    "tpu.trace_start"() <{level = 10 : i32, message = "bqe,bke->bqk"}> : () -> ()
    %cst_10 = arith.constant dense<0.000000e+00> : vector<1x16x16xf32>
    %17 = tpu.matmul %14, %16, %cst_10 {dimension_numbers = #tpu.dot_dimension_numbers<[2], [2], [1], [1], [0, 0, 0, 1, 1, 1], [0], [0]>} : vector<1x16x32xf32>, vector<1x16x32xf32>, vector<1x16x16xf32> -> vector<1x16x16xf32>
    "tpu.trace_stop"() : () -> ()
    %c0_11 = arith.constant 0 : index
    %c0_12 = arith.constant 0 : index
    %18 = vector.load %arg5[%c0_11, %c0_12] : memref<16x16xf32, #tpu.memory_space<vmem>>, vector<16x16xf32>
    %19 = vector.shape_cast %18 : vector<16x16xf32> to vector<1x16x16xf32>
    %20 = arith.addf %17, %19 : vector<1x16x16xf32>
    %cst_13 = arith.constant dense<0xFF800000> : vector<1x16xf32>
    %21 = vector.multi_reduction <maximumf>, %20, %cst_13 [2] : vector<1x16x16xf32> to vector<1x16xf32>
    %22 = vector.shape_cast %21 : vector<1x16xf32> to vector<1x16x1xf32>
    %23 = vector.broadcast %22 : vector<1x16x1xf32> to vector<1x16x16xf32>
    %24 = arith.subf %20, %23 : vector<1x16x16xf32>
    %25 = math.exp %24 : vector<1x16x16xf32>
    %c0_14 = arith.constant 0 : index
    %c0_15 = arith.constant 0 : index
    %26 = vector.load %arg6[%c0_14, %c0_15] : memref<16x16xf32, #tpu.memory_space<vmem>>, vector<16x16xf32>
    %27 = vector.shape_cast %26 : vector<16x16xf32> to vector<1x16x16xf32>
    %28 = arith.mulf %25, %27 : vector<1x16x16xf32>
    %cst_16 = arith.constant dense<0.000000e+00> : vector<1x16xf32>
    %29 = vector.multi_reduction <add>, %28, %cst_16 [2] : vector<1x16x16xf32> to vector<1x16xf32>
    %30 = vector.shape_cast %29 : vector<1x16xf32> to vector<1x16x1xf32>
    %31 = tpu.reciprocal %30 {approx = true} : vector<1x16x1xf32> -> vector<1x16x1xf32>
    %32 = vector.broadcast %31 : vector<1x16x1xf32> to vector<1x16x16xf32>
    %33 = arith.mulf %28, %32 : vector<1x16x16xf32>
    "tpu.trace_start"() <{level = 10 : i32, message = "bqk,bkf->bqf"}> : () -> ()
    %cst_17 = arith.constant dense<0.000000e+00> : vector<1x16x32xf32>
    %34 = tpu.matmul %33, %1, %cst_17 {dimension_numbers = #tpu.dot_dimension_numbers<[2], [1], [1], [2], [0, 0, 0, 1, 1, 2], [0], [0]>} : vector<1x16x16xf32>, vector<1x16x32xf32>, vector<1x16x32xf32> -> vector<1x16x32xf32>
    "tpu.trace_stop"() : () -> ()
    %35 = arith.subf %34, %0 : vector<1x16x32xf32>
    %cst_18 = arith.constant 5.000000e-01 : f32
    %36 = vector.broadcast %cst_18 : f32 to vector<1x16x32xf32>
    %37 = arith.mulf %36, %35 : vector<1x16x32xf32>
    %38 = arith.addf %0, %37 : vector<1x16x32xf32>
    %c0_19 = arith.constant 0 : index
    %c0_20 = arith.constant 0 : index
    %c0_21 = arith.constant 0 : index
    %39 = vector.load %arg7[%c0_19, %c0_20, %c0_21] : memref<1x16x32xf32, #tpu.memory_space<vmem>>, vector<1x16x32xf32>
    tpu.vector_store %arg7[%c0_19, %c0_20, %c0_21], %38 {strides = array<i32>} : memref<1x16x32xf32, #tpu.memory_space<vmem>>, vector<1x16x32xf32>,
    %c0_22 = arith.constant 0 : index
    %c0_23 = arith.constant 0 : index
    %c0_24 = arith.constant 0 : index
    %40 = vector.load %arg8[%c0_22, %c0_23, %c0_24] : memref<1x16x16xf32, #tpu.memory_space<vmem>>, vector<1x16x16xf32>
    tpu.vector_store %arg8[%c0_22, %c0_23, %c0_24], %33 {strides = array<i32>} : memref<1x16x16xf32, #tpu.memory_space<vmem>>, vector<1x16x16xf32>,
    return
  }
  func.func @transform_0(%arg0: i32) -> (i32, i32, i32) {
    %c0_i32 = arith.constant 0 : i32
    %c0_i32_0 = arith.constant 0 : i32
    %c0_i32_1 = arith.constant 0 : i32
    return %arg0, %c0_i32, %c0_i32_0 : i32, i32, i32
  }
  func.func @transform_1(%arg0: i32) -> (i32, i32, i32) {
    %c0_i32 = arith.constant 0 : i32
    %c0_i32_0 = arith.constant 0 : i32
    %c0_i32_1 = arith.constant 0 : i32
    return %arg0, %c0_i32, %c0_i32_0 : i32, i32, i32
  }
  func.func @transform_2(%arg0: i32) -> (i32, i32) {
    %c0_i32 = arith.constant 0 : i32
    %c0_i32_0 = arith.constant 0 : i32
    %c0_i32_1 = arith.constant 0 : i32
    return %c0_i32, %c0_i32_0 : i32, i32
  }
  func.func @transform_3(%arg0: i32) -> (i32, i32) {
    %c0_i32 = arith.constant 0 : i32
    %c0_i32_0 = arith.constant 0 : i32
    %c0_i32_1 = arith.constant 0 : i32
    return %c0_i32, %c0_i32_0 : i32, i32
  }
  func.func @transform_4(%arg0: i32) -> (i32, i32) {
    %c0_i32 = arith.constant 0 : i32
    %c0_i32_0 = arith.constant 0 : i32
    %c0_i32_1 = arith.constant 0 : i32
    return %c0_i32, %c0_i32_0 : i32, i32
  }
  func.func @transform_5(%arg0: i32) -> (i32, i32) {
    %c0_i32 = arith.constant 0 : i32
    %c0_i32_0 = arith.constant 0 : i32
    %c0_i32_1 = arith.constant 0 : i32
    return %c0_i32, %c0_i32_0 : i32, i32
  }
  func.func @transform_6(%arg0: i32) -> (i32, i32, i32) {
    %c0_i32 = arith.constant 0 : i32
    %c0_i32_0 = arith.constant 0 : i32
    %c0_i32_1 = arith.constant 0 : i32
    return %arg0, %c0_i32, %c0_i32_0 : i32, i32, i32
  }
  func.func @transform_7(%arg0: i32) -> (i32, i32, i32) {
    %c0_i32 = arith.constant 0 : i32
    %c0_i32_0 = arith.constant 0 : i32
    %c0_i32_1 = arith.constant 0 : i32
    return %arg0, %c0_i32, %c0_i32_0 : i32, i32, i32
  }
}

</mosaic_0001>

<llo_original>
// kernel: tpu_custom_call.1
$region0: #{tpu_custom_call.1}
  #allocation0 [shape = 'u32[]', space=smem, size = 0x4, offset = 0x4, fixed_abs, tag = 'smem constant byte address 0x4 - core index']
  #allocation1 [shape = 'u32[72,128]{1,0:T(1,128)}', space=vmem, size = 0x9000, scoped, tag = 'internal scratch']
  %s0 = inlined_call_operand.hbm [shape: f32[2,16,32], index: 0, kind: input, shape index: {}]
  %s1 = inlined_call_operand.hbm [shape: f32[2,16,32], index: 1, kind: input, shape index: {}]
  %s2 = inlined_call_operand.hbm [shape: f32[32,32], index: 2, kind: input, shape index: {}]
  %s3 = inlined_call_operand.vmem [shape: f32[1,32], index: 3, kind: input, shape index: {}]
  %s4 = inlined_call_operand.hbm [shape: f32[16,16], index: 4, kind: input, shape index: {}]
  %s5 = inlined_call_operand.hbm [shape: f32[16,16], index: 5, kind: input, shape index: {}]
  %s6 = inlined_call_operand.hbm [shape: f32[2,16,32], index: 6, kind: output, shape index: {0}]
  %s7 = inlined_call_operand.hbm [shape: f32[2,16,16], index: 7, kind: output, shape index: {1}]
  %8 = xla_tuple %s6, %s7
  %s9 = sld [smem:[#allocation0]]
  $region85: #{tpu_custom_call.1} parent=0
    _
  %s11 = ssub.s32 1, %s9
  %s12 = scalar_select 0, %s11, %s9
  $region1: #{tpu_custom_call.1} parent=0
    #allocation2 [shape = 'u8[16384]{0}', space=vmem, size = 0x4000, scoped, tag = 'input window, operand 0']
    #allocation3 [shape = 's32[2]{0}', space=sflag, size = 0x8, scoped, tag = 'scoped memory for tpu_custom_call.1']
    #allocation4 [shape = 's32[2]{0}', space=sflag, size = 0x8, scoped, tag = 'scoped memory for tpu_custom_call.1']
    #allocation5 [shape = 'u8[16384]{0}', space=vmem, size = 0x4000, scoped, tag = 'input window, operand 1']
    #allocation6 [shape = 's32[2]{0}', space=sflag, size = 0x8, scoped, tag = 'scoped memory for tpu_custom_call.1']
    #allocation7 [shape = 'u8[16384]{0}', space=vmem, size = 0x4000, scoped, tag = 'input window, operand 2, single buffered']
    #allocation8 [shape = 'u8[8192]{0}', space=vmem, size = 0x2000, scoped, tag = 'input window, operand 4, single buffered']
    #allocation9 [shape = 's32[1]{0}', space=sflag, size = 0x4, scoped, tag = 'scoped memory for tpu_custom_call.1']
    #allocation10 [shape = 'u8[8192]{0}', space=vmem, size = 0x2000, scoped, tag = 'input window, operand 5, single buffered']
    #allocation11 [shape = 'u8[16384]{0}', space=vmem, size = 0x4000, scoped, tag = 'output window, operand 0']
    #allocation12 [shape = 'u8[16384]{0}', space=vmem, size = 0x4000, scoped, tag = 'output window, operand 1']
    #allocation13 [shape = 's32[2]{0}', space=sflag, size = 0x8, scoped, tag = 'scoped memory for tpu_custom_call.1']
    %13 = vsyncpa [#allocation3], 0
    %s14 = scalar_lea.sflag [#allocation3], 1
    %15 = vsyncpa %s14, 0
    %16 = vsyncpa [#allocation6], 0
    %s17 = scalar_lea.sflag [#allocation6], 1
    %18 = vsyncpa %s17, 0
    %19 = vsyncpa [#allocation9], 0
    %20 = vsyncpa [#allocation4], 0
    %s21 = scalar_lea.sflag [#allocation4], 1
    %22 = vsyncpa %s21, 0
    %23 = vsyncpa [#allocation13], 0
    %s24 = scalar_lea.sflag [#allocation13], 1
    %25 = vsyncpa %s24, 0
    loop: start=0, step=1, limit=4
    $region2: #{tpu_custom_call.1} parent=1 // loop_pre_header
      _
    $region3: #{tpu_custom_call.1} parent=1 // loop_header
      %s27 = sphi 0, %s31
      %p28 = scmp.ge.s32.totalorder %s27, 4
      %s37 = sphi 0, %s39
      %s40 = sphi 0, %s37
      %s41 = sphi 0, %s40
      %s57 = sphi 0, %s41
      %s63 = sphi 0, %s65
      %s66 = sphi 0, %s63
      %s67 = sphi 0, %s66
      %s83 = sphi 0, %s67
      %s87 = sphi 0, %s87
      %s89 = sphi 0, %s87
      %s90 = sphi 0, %s89
      %s104 = sphi 0, %s90
      %s108 = sphi 0, %s108
      %s110 = sphi 0, %s108
      %s111 = sphi 0, %s110
      %s125 = sphi 0, %s111
      %s129 = sphi 0, %s129
      %s131 = sphi 0, %s129
      %s132 = sphi 0, %s131
      %s146 = sphi 0, %s132
      %s150 = sphi 0, %s150
      %s152 = sphi 0, %s150
      %s153 = sphi 0, %s152
      %s167 = sphi 0, %s153
      %s173 = sphi 0, %s175
      %s176 = sphi 0, %s173
      %s177 = sphi 0, %s176
      %s193 = sphi 0, %s177
      %s199 = sphi 0, %s201
      %s202 = sphi 0, %s199
      %s203 = sphi 0, %s202
      %s219 = sphi 0, %s203
    $region4: #{tpu_custom_call.1} parent=1 // loop_header_branch
      %30 = sbr.rel (%p28) target = $region8
    $region5: #{tpu_custom_call.1} parent=1 // loop_body
      %s32 = ssub.s32 %s27, 1
      %s33 = ssub.s32 %s27, 2
      %s34 = sadd.s32 %s27, 1
      %s35 = ssub.s32 %s27, %s34
      %p36 = scmp.eq.s32.totalorder %s35, 0
      %s38 = sadd.s32 %s37, 1
      %s39 = scalar_select %p36, %s37, %s38
      %p42 = pneg %p36
      %p43 = scmp.eq.s32.totalorder %s27, 1
      %p44 = por %p42, %p43
      %p45 = scmp.ne.s32.totalorder %s37, %s40
      %p46 = scmp.eq.s32.totalorder %s27, 0
      %p47 = por %p45, %p46
      %p48 = scmp.ne.s32.totalorder %s37, %s40
      %p49 = scmp.eq.s32.totalorder %s32, 1
      %p50 = por %p48, %p49
      %p51 = scmp.ne.s32.totalorder %s40, %s41
      %p52 = scmp.eq.s32.totalorder %s32, 0
      %p53 = por %p51, %p52
      %p54 = scmp.ne.s32.totalorder %s40, %s41
      %p55 = scmp.eq.s32.totalorder %s33, 1
      %p56 = por %p54, %p55
      %p58 = scmp.ne.s32.totalorder %s41, %s57
      %p59 = scmp.eq.s32.totalorder %s33, 0
      %p60 = por %p58, %p59
      %s61 = ssub.s32 %s27, %s34
      %p62 = scmp.eq.s32.totalorder %s61, 0
      %s64 = sadd.s32 %s63, 1
      %s65 = scalar_select %p62, %s63, %s64
      %p68 = pneg %p62
      %p69 = scmp.eq.s32.totalorder %s27, 1
      %p70 = por %p68, %p69
      %p71 = scmp.ne.s32.totalorder %s63, %s66
      %p72 = scmp.eq.s32.totalorder %s27, 0
      %p73 = por %p71, %p72
      %p74 = scmp.ne.s32.totalorder %s63, %s66
      %p75 = scmp.eq.s32.totalorder %s32, 1
      %p76 = por %p74, %p75
      %p77 = scmp.ne.s32.totalorder %s66, %s67
      %p78 = scmp.eq.s32.totalorder %s32, 0
      %p79 = por %p77, %p78
      %p80 = scmp.ne.s32.totalorder %s66, %s67
      %p81 = scmp.eq.s32.totalorder %s33, 1
      %p82 = por %p80, %p81
      %p84 = scmp.ne.s32.totalorder %s67, %s83
      %p85 = scmp.eq.s32.totalorder %s33, 0
      %p86 = por %p84, %p85
      %s88 = sadd.s32 %s87, 1
      %p91 = scmp.eq.s32.totalorder %s27, 1
      %p92 = scmp.ne.s32.totalorder %s87, %s89
      %p93 = scmp.eq.s32.totalorder %s27, 0
      %p94 = por %p92, %p93
      %p95 = scmp.ne.s32.totalorder %s87, %s89
      %p96 = scmp.eq.s32.totalorder %s32, 1
      %p97 = por %p95, %p96
      %p98 = scmp.ne.s32.totalorder %s89, %s90
      %p99 = scmp.eq.s32.totalorder %s32, 0
      %p100 = por %p98, %p99
      %p101 = scmp.ne.s32.totalorder %s89, %s90
      %p102 = scmp.eq.s32.totalorder %s33, 1
      %p103 = por %p101, %p102
      %p105 = scmp.ne.s32.totalorder %s90, %s104
      %p106 = scmp.eq.s32.totalorder %s33, 0
      %p107 = por %p105, %p106
      %s109 = sadd.s32 %s108, 1
      %p112 = scmp.eq.s32.totalorder %s27, 1
      %p113 = scmp.ne.s32.totalorder %s108, %s110
      %p114 = scmp.eq.s32.totalorder %s27, 0
      %p115 = por %p113, %p114
      %p116 = scmp.ne.s32.totalorder %s108, %s110
      %p117 = scmp.eq.s32.totalorder %s32, 1
      %p118 = por %p116, %p117
      %p119 = scmp.ne.s32.totalorder %s110, %s111
      %p120 = scmp.eq.s32.totalorder %s32, 0
      %p121 = por %p119, %p120
      %p122 = scmp.ne.s32.totalorder %s110, %s111
      %p123 = scmp.eq.s32.totalorder %s33, 1
      %p124 = por %p122, %p123
      %p126 = scmp.ne.s32.totalorder %s111, %s125
      %p127 = scmp.eq.s32.totalorder %s33, 0
      %p128 = por %p126, %p127
      %s130 = sadd.s32 %s129, 1
      %p133 = scmp.eq.s32.totalorder %s27, 1
      %p134 = scmp.ne.s32.totalorder %s129, %s131
      %p135 = scmp.eq.s32.totalorder %s27, 0
      %p136 = por %p134, %p135
      %p137 = scmp.ne.s32.totalorder %s129, %s131
      %p138 = scmp.eq.s32.totalorder %s32, 1
      %p139 = por %p137, %p138
      %p140 = scmp.ne.s32.totalorder %s131, %s132
      %p141 = scmp.eq.s32.totalorder %s32, 0
      %p142 = por %p140, %p141
      %p143 = scmp.ne.s32.totalorder %s131, %s132
      %p144 = scmp.eq.s32.totalorder %s33, 1
      %p145 = por %p143, %p144
      %p147 = scmp.ne.s32.totalorder %s132, %s146
      %p148 = scmp.eq.s32.totalorder %s33, 0
      %p149 = por %p147, %p148
      %s151 = sadd.s32 %s150, 1
      %p154 = scmp.eq.s32.totalorder %s27, 1
      %p155 = scmp.ne.s32.totalorder %s150, %s152
      %p156 = scmp.eq.s32.totalorder %s27, 0
      %p157 = por %p155, %p156
      %p158 = scmp.ne.s32.totalorder %s150, %s152
      %p159 = scmp.eq.s32.totalorder %s32, 1
      %p160 = por %p158, %p159
      %p161 = scmp.ne.s32.totalorder %s152, %s153
      %p162 = scmp.eq.s32.totalorder %s32, 0
      %p163 = por %p161, %p162
      %p164 = scmp.ne.s32.totalorder %s152, %s153
      %p165 = scmp.eq.s32.totalorder %s33, 1
      %p166 = por %p164, %p165
      %p168 = scmp.ne.s32.totalorder %s153, %s167
      %p169 = scmp.eq.s32.totalorder %s33, 0
      %p170 = por %p168, %p169
      %s171 = ssub.s32 %s27, %s34
      %p172 = scmp.eq.s32.totalorder %s171, 0
      %s174 = sadd.s32 %s173, 1
      %s175 = scalar_select %p172, %s173, %s174
      %p178 = pneg %p172
      %p179 = scmp.eq.s32.totalorder %s27, 1
      %p180 = por %p178, %p179
      %p181 = scmp.ne.s32.totalorder %s173, %s176
      %p182 = scmp.eq.s32.totalorder %s27, 0
      %p183 = por %p181, %p182
      %p184 = scmp.ne.s32.totalorder %s173, %s176
      %p185 = scmp.eq.s32.totalorder %s32, 1
      %p186 = por %p184, %p185
      %p187 = scmp.ne.s32.totalorder %s176, %s177
      %p188 = scmp.eq.s32.totalorder %s32, 0
      %p189 = por %p187, %p188
      %p190 = scmp.ne.s32.totalorder %s176, %s177
      %p191 = scmp.eq.s32.totalorder %s33, 1
      %p192 = por %p190, %p191
      %p194 = scmp.ne.s32.totalorder %s177, %s193
      %p195 = scmp.eq.s32.totalorder %s33, 0
      %p196 = por %p194, %p195
      %s197 = ssub.s32 %s27, %s34
      %p198 = scmp.eq.s32.totalorder %s197, 0
      %s200 = sadd.s32 %s199, 1
      %s201 = scalar_select %p198, %s199, %s200
      %p204 = pneg %p198
      %p205 = scmp.eq.s32.totalorder %s27, 1
      %p206 = por %p204, %p205
      %p207 = scmp.ne.s32.totalorder %s199, %s202
      %p208 = scmp.eq.s32.totalorder %s27, 0
      %p209 = por %p207, %p208
      %p210 = scmp.ne.s32.totalorder %s199, %s202
      %p211 = scmp.eq.s32.totalorder %s32, 1
      %p212 = por %p210, %p211
      %p213 = scmp.ne.s32.totalorder %s202, %s203
      %p214 = scmp.eq.s32.totalorder %s32, 0
      %p215 = por %p213, %p214
      %p216 = scmp.ne.s32.totalorder %s202, %s203
      %p217 = scmp.eq.s32.totalorder %s33, 1
      %p218 = por %p216, %p217
      %p220 = scmp.ne.s32.totalorder %s203, %s219
      %p221 = scmp.eq.s32.totalorder %s33, 0
      %p222 = por %p220, %p221
      %p223 = scmp.le.s32.totalorder 1, %s27
      %p224 = scmp.lt.s32.totalorder %s27, 3
      %p225 = pnand %p223, %p224
      %p226 = pneg %p225
      // Predicated region
      $region9: #{tpu_custom_call.1} parent=5 // pred_check
        _
      $region10: #{tpu_custom_call.1} parent=5 // pred_check_branch
        %228 = sbr.rel (%p225) target = $region12
      $region11: #{tpu_custom_call.1} parent=5 // pred_region
        %s229 = ssub.s32 %s27, 1
        // Predicated region
        $region13: #{tpu_custom_call.1} parent=11 // pred_check
          %p230 = pneg %p100
        $region14: #{tpu_custom_call.1} parent=11 // pred_check_branch
          %232 = sbr.rel (%p230) target = $region16
        $region15: #{tpu_custom_call.1} parent=11 // pred_region
          %234 = vsyncadd [#allocation6], 0
          %s235 = sshll.u32 %s2, 4
          %s236 = int_to_ptr.hbm [resolvable:$true] %s235
          %s237 = sshll.u32 [#allocation7], 4
          %s238 = int_to_ptr.vmem [resolvable:$true] %s237
          %243 = dma.hbm_to_vmem [thread:$0]  %s236, 512, %s238, [#allocation6], 128, 128, 8
        $region16: #{tpu_custom_call.1} parent=11 // pred_fallthru
          _
        // Predicated region
        $region17: #{tpu_custom_call.1} parent=11 // pred_check
          %p244 = pneg %p121
        $region18: #{tpu_custom_call.1} parent=11 // pred_check_branch
          %246 = sbr.rel (%p244) target = $region20
        $region19: #{tpu_custom_call.1} parent=11 // pred_region
          _
        $region20: #{tpu_custom_call.1} parent=11 // pred_fallthru
          _
        // Predicated region
        $region21: #{tpu_custom_call.1} parent=11 // pred_check
          %p247 = pneg %p142
        $region22: #{tpu_custom_call.1} parent=11 // pred_check_branch
          %249 = sbr.rel (%p247) target = $region24
        $region23: #{tpu_custom_call.1} parent=11 // pred_region
          %251 = vsyncadd [#allocation9], 0
          %s252 = sshll.u32 %s4, 4
          %s253 = int_to_ptr.hbm [resolvable:$true] %s252
          %s254 = sshll.u32 [#allocation8], 4
          %s255 = int_to_ptr.vmem [resolvable:$true] %s254
          %260 = dma.hbm_to_vmem [thread:$0]  %s253, 256, %s255, [#allocation9], 128, 128, 8
        $region24: #{tpu_custom_call.1} parent=11 // pred_fallthru
          _
        // Predicated region
        $region25: #{tpu_custom_call.1} parent=11 // pred_check
          %p261 = pneg %p163
        $region26: #{tpu_custom_call.1} parent=11 // pred_check_branch
          %263 = sbr.rel (%p261) target = $region28
        $region27: #{tpu_custom_call.1} parent=11 // pred_region
          %265 = vsyncadd [#allocation9], 0
          %s266 = sshll.u32 %s5, 4
          %s267 = int_to_ptr.hbm [resolvable:$true] %s266
          %s268 = sshll.u32 [#allocation10], 4
          %s269 = int_to_ptr.vmem [resolvable:$true] %s268
          %274 = dma.hbm_to_vmem [thread:$0]  %s267, 256, %s269, [#allocation9], 128, 128, 8
        $region28: #{tpu_custom_call.1} parent=11 // pred_fallthru
          _
      $region12: #{tpu_custom_call.1} parent=5 // pred_fallthru
        _
      %p275 = scmp.lt.s32.totalorder %s27, 2
      // Predicated region
      $region29: #{tpu_custom_call.1} parent=5 // pred_check
        %p276 = pneg %p275
      $region30: #{tpu_custom_call.1} parent=5 // pred_check_branch
        %278 = sbr.rel (%p276) target = $region32
      $region31: #{tpu_custom_call.1} parent=5 // pred_region
        // Predicated region
        $region33: #{tpu_custom_call.1} parent=31 // pred_check
          %p279 = pneg %p47
        $region34: #{tpu_custom_call.1} parent=31 // pred_check_branch
          %281 = sbr.rel (%p279) target = $region36
        $region35: #{tpu_custom_call.1} parent=31 // pred_region
          %s282 = sand.u32 %s37, 1
          %s283 = scalar_lea.sflag [#allocation3], %s282
          %s284 = sand.u32 %s37, 1
          %s285 = smul.addr %s284, 16
          %s286 = scalar_lea.vmem [#allocation2], %s285
          %288 = vsyncadd %s283, 0
          %s289 = smul.addr %s27, 2
          %s290 = smul.addr %s289, 8
          %s291 = scalar_lea.hbm %s0, %s290
          %s292 = sshll.u32 %s291, 4
          %s293 = int_to_ptr.hbm [resolvable:$true] %s292
          %s294 = sshll.u32 %s286, 4
          %s295 = int_to_ptr.vmem [resolvable:$true] %s294
          %300 = dma.hbm_to_vmem [thread:$0]  %s293, 256, %s295, %s283, 128, 128, 8
        $region36: #{tpu_custom_call.1} parent=31 // pred_fallthru
          _
        // Predicated region
        $region37: #{tpu_custom_call.1} parent=31 // pred_check
          %p301 = pneg %p73
        $region38: #{tpu_custom_call.1} parent=31 // pred_check_branch
          %303 = sbr.rel (%p301) target = $region40
        $region39: #{tpu_custom_call.1} parent=31 // pred_region
          %s304 = sand.u32 %s27, 1
          %s305 = scalar_lea.sflag [#allocation6], %s304
          %s306 = sand.u32 %s63, 1
          %s307 = smul.addr %s306, 16
          %s308 = scalar_lea.vmem [#allocation5], %s307
          %310 = vsyncadd %s305, 0
          %s311 = smul.addr %s27, 2
          %s312 = smul.addr %s311, 8
          %s313 = scalar_lea.hbm %s1, %s312
          %s314 = sshll.u32 %s313, 4
          %s315 = int_to_ptr.hbm [resolvable:$true] %s314
          %s316 = sshll.u32 %s308, 4
          %s317 = int_to_ptr.vmem [resolvable:$true] %s316
          %322 = dma.hbm_to_vmem [thread:$0]  %s315, 256, %s317, %s305, 128, 128, 8
        $region40: #{tpu_custom_call.1} parent=31 // pred_fallthru
          _
      $region32: #{tpu_custom_call.1} parent=5 // pred_fallthru
        _
      %p323 = scmp.le.s32.totalorder 1, %s27
      %p324 = scmp.lt.s32.totalorder %s27, 3
      %p325 = pnand %p323, %p324
      %p326 = pneg %p325
      // Predicated region
      $region41: #{tpu_custom_call.1} parent=5 // pred_check
        _
      $region42: #{tpu_custom_call.1} parent=5 // pred_check_branch
        %328 = sbr.rel (%p325) target = $region44
      $region43: #{tpu_custom_call.1} parent=5 // pred_region
        %s329 = ssub.s32 %s27, 1
        %s330 = sand.u32 %s40, 1
        %s331 = scalar_lea.sflag [#allocation3], %s330
        %s332 = sand.u32 %s40, 1
        %s333 = smul.addr %s332, 16
        %s334 = scalar_lea.vmem [#allocation2], %s333
        // Predicated region
        $region45: #{tpu_custom_call.1} parent=43 // pred_check
          %p335 = pneg %p53
        $region46: #{tpu_custom_call.1} parent=43 // pred_check_branch
          %337 = sbr.rel (%p335) target = $region48
        $region47: #{tpu_custom_call.1} parent=43 // pred_region
          %339 = dma.done %s331, 256
        $region48: #{tpu_custom_call.1} parent=43 // pred_fallthru
          _
        %s340 = sand.u32 %s32, 1
        %s341 = scalar_lea.sflag [#allocation6], %s340
        %s342 = sand.u32 %s66, 1
        %s343 = smul.addr %s342, 16
        %s344 = scalar_lea.vmem [#allocation5], %s343
        // Predicated region
        $region49: #{tpu_custom_call.1} parent=43 // pred_check
          %p345 = pneg %p79
        $region50: #{tpu_custom_call.1} parent=43 // pred_check_branch
          %347 = sbr.rel (%p345) target = $region52
        $region51: #{tpu_custom_call.1} parent=43 // pred_region
          %349 = dma.done %s341, 256
        $region52: #{tpu_custom_call.1} parent=43 // pred_fallthru
          _
        // Predicated region
        $region53: #{tpu_custom_call.1} parent=43 // pred_check
          %p350 = pneg %p100
        $region54: #{tpu_custom_call.1} parent=43 // pred_check_branch
          %352 = sbr.rel (%p350) target = $region56
        $region55: #{tpu_custom_call.1} parent=43 // pred_region
          %354 = dma.done [#allocation6], 512
        $region56: #{tpu_custom_call.1} parent=43 // pred_fallthru
          _
        // Predicated region
        $region57: #{tpu_custom_call.1} parent=43 // pred_check
          %p355 = pneg %p142
        $region58: #{tpu_custom_call.1} parent=43 // pred_check_branch
          %357 = sbr.rel (%p355) target = $region60
        $region59: #{tpu_custom_call.1} parent=43 // pred_region
          %359 = dma.done [#allocation9], 256
        $region60: #{tpu_custom_call.1} parent=43 // pred_fallthru
          _
        // Predicated region
        $region61: #{tpu_custom_call.1} parent=43 // pred_check
          %p360 = pneg %p163
        $region62: #{tpu_custom_call.1} parent=43 // pred_check_branch
          %362 = sbr.rel (%p360) target = $region64
        $region63: #{tpu_custom_call.1} parent=43 // pred_region
          %364 = dma.done [#allocation9], 256
        $region64: #{tpu_custom_call.1} parent=43 // pred_fallthru
          _
        %s365 = sand.u32 %s40, 1
        %s366 = scalar_lea.sflag [#allocation3], %s365
        %s367 = sand.u32 %s40, 1
        %s368 = smul.addr %s367, 16
        %s369 = scalar_lea.vmem [#allocation2], %s368
        %p370 = pneg %p53
        %p371 = pneg %p50
        %s372 = sand.u32 %s32, 1
        %s373 = scalar_lea.sflag [#allocation6], %s372
        %s374 = sand.u32 %s66, 1
        %s375 = smul.addr %s374, 16
        %s376 = scalar_lea.vmem [#allocation5], %s375
        %p377 = pneg %p79
        %p378 = pneg %p76
        %p379 = pneg %p100
        %p380 = pneg %p97
        %p381 = pneg %p121
        %p382 = pneg %p118
        %p383 = pneg %p142
        %p384 = pneg %p139
        %p385 = pneg %p163
        %p386 = pneg %p160
        %p387 = pneg %p189
        %p388 = pneg %p186
        %s389 = sand.u32 %s176, 1
        %s390 = scalar_lea.sflag [#allocation4], %s389
        %s391 = sand.u32 %s176, 1
        %s392 = smul.addr %s391, 16
        %s393 = scalar_lea.vmem [#allocation11], %s392
        %p394 = pneg %p215
        %p395 = pneg %p212
        %s396 = sand.u32 %s202, 1
        %s397 = scalar_lea.sflag [#allocation13], %s396
        %s398 = sand.u32 %s202, 1
        %s399 = smul.addr %s398, 16
        %s400 = scalar_lea.vmem [#allocation12], %s399
        %v401 = vld [vmem:[%s334] sm:$0xff]
        %v402 = vld [vmem:[%s334 + $0x8] sm:$0xff]
        %v403 = vld [vmem:[%s344] sm:$0xff]
        %v404 = vld [vmem:[%s344 + $0x8] sm:$0xff]
        %v405 = vld [vmem:[#allocation7] sm:$0xff]
        %v406 = vld [vmem:[#allocation7 + $0x8] sm:$0xff]
        %v407 = vld [vmem:[#allocation7 + $0x10] sm:$0xff]
        %v408 = vld [vmem:[#allocation7 + $0x18] sm:$0xff]
        %v409 = vld [vmem:[%s3] sm:$0x1]
        %v411 = vperm.slane %v409, 0
        %vm413 = vcmask 261120
        %v415 = vsel %vm413, %v401, 0
        %v418 = vsel %vm413, %v402, 0
        %v421 = vsel %vm413, %v403, 0
        %v424 = vsel %vm413, %v404, 0
        %426 = vmatpush.msra.mxu0 0.0
        %427 = vmatpush.msra.mxu0 0.0
        %428 = vmatpush.msra.mxu0 0.0
        %429 = vmatpush.msra.mxu0 0.0
        %430 = vmatpush.msra.mxu0 0.0
        %431 = vmatpush.msra.mxu0 0.0
        %432 = vmatpush.msra.mxu0 0.0
        %433 = vmatpush.msra.mxu0 0.0
        %434 = vmatpush.msra.mxu0 0.0
        %435 = vmatpush.msra.mxu0 0.0
        %436 = vmatpush.msra.mxu0 0.0
        %437 = vmatpush.msra.mxu0 0.0
        %438 = vmatpush.msra.mxu0 %v408
        %439 = vmatpush.msra.mxu0 %v407
        %440 = vmatpush.msra.mxu0 %v406
        %441 = vmatpush.msra.mxu0 %v405
        %442 = vmatmul.f32.gmra.mxu0 %v415
        %v443 = vpop.f32.mrf.mxu0
        %v444 = vadd.f32 %v411, %v443
        %445 = vmatmul.f32.gmra.mxu0 %v418
        %v446 = vpop.f32.mrf.mxu0
        %v447 = vadd.f32 %v411, %v446
        %448 = vmatmul.f32.gmra.mxu0 %v421
        %v449 = vpop.f32.mrf.mxu0
        %v450 = vadd.f32 %v411, %v449
        %451 = vmatmul.f32.gmra.mxu0 %v424
        %v452 = vpop.f32.mrf.mxu0
        %v453 = vadd.f32 %v411, %v452
        %454 = vdwg.mxu0
        %v455 = vmul.f32 %v444, 0.1
        %v456 = vmul.f32 %v447, 0.1
        %v457 = vmul.f32 %v450, 0.1
        %v458 = vmul.f32 %v453, 0.1
        %v459 = vmax.f32 %v444, %v455
        %v460 = vmax.f32 %v447, %v456
        %v461 = vmax.f32 %v450, %v457
        %v462 = vmax.f32 %v453, %v458
        %v463 = vld [vmem:[#allocation8] sm:$0xff]
        %v464 = vld [vmem:[#allocation8 + $0x8] sm:$0xff]
        %v466 = vsel %vm413, %v459, 0
        %v469 = vsel %vm413, %v460, 0
        %v472 = vsel %vm413, %v461, 0
        %v475 = vsel %vm413, %v462, 0
        %477 = vmatpush.xpose.msra.mxu0 0.0
        %478 = vmatpush.xpose.msra.mxu0 0.0
        %479 = vmatpush.xpose.msra.mxu0 0.0
        %480 = vmatpush.xpose.msra.mxu0 0.0
        %481 = vmatpush.xpose.msra.mxu0 0.0
        %482 = vmatpush.xpose.msra.mxu0 0.0
        %483 = vmatpush.xpose.msra.mxu0 0.0
        %484 = vmatpush.xpose.msra.mxu0 0.0
        %485 = vmatpush.xpose.msra.mxu0 0.0
        %486 = vmatpush.xpose.msra.mxu0 0.0
        %487 = vmatpush.xpose.msra.mxu0 0.0
        %488 = vmatpush.xpose.msra.mxu0 0.0
        %489 = vmatpush.xpose.msra.mxu0 0.0
        %490 = vmatpush.xpose.msra.mxu0 0.0
        %491 = vmatpush.xpose.msra.mxu0 %v475
        %492 = vmatpush.xpose.msra.mxu0 %v472
        %493 = vmatmul.f32.gmra.mxu0 %v466
        %v494 = vpop.f32.mrf.mxu0
        %v495 = vadd.f32 %v463, %v494
        %496 = vmatmul.f32.gmra.mxu0 %v469
        %v497 = vpop.f32.mrf.mxu0
        %v498 = vadd.f32 %v464, %v497
        %499 = vdwg.mxu0
        %vm500 = vcmask 130048
        %v501 = vsel %vm500, %v495, -inf
        %502 = vmax.xlane.f32.xlu0 %v501
        %v503 = vpop.xlane.xlu0 %502
        %v504 = vsel %vm500, %v498, -inf
        %505 = vmax.xlane.f32.xlu0 %v504
        %v506 = vpop.xlane.xlu0 %505
        %v507 = vsub.f32 %v495, %v503
        %v508 = vsub.f32 %v498, %v506
        %v509 = vmul.f32 %v507, 1.442695
        %v510 = vpow.pop %v509
        %v511 = vmul.f32 %v508, 1.442695
        %v512 = vpow.pop %v511
        %v513 = vld [vmem:[#allocation10] sm:$0xff]
        %v514 = vld [vmem:[#allocation10 + $0x8] sm:$0xff]
        %v515 = vmul.f32 %v510, %v513
        %v516 = vmul.f32 %v512, %v514
        %v517 = vsel %vm500, %v515, 0.0
        %518 = vadd.xlane.f32.xlu0 %v517
        %v519 = vpop.xlane.xlu0 %518
        %v520 = vsel %vm500, %v516, 0.0
        %521 = vadd.xlane.f32.xlu0 %v520
        %v522 = vpop.xlane.xlu0 %521
        %v523 = vrcp.pop %v519
        %v524 = vrcp.pop %v522
        %v525 = vmul.f32 %v515, %v523
        %v526 = vmul.f32 %v516, %v524
        %v528 = vsel %vm500, %v525, 0
        %v531 = vsel %vm500, %v526, 0
        %533 = vmatpush.msra.mxu0 0.0
        %534 = vmatpush.msra.mxu0 0.0
        %535 = vmatpush.msra.mxu0 0.0
        %536 = vmatpush.msra.mxu0 0.0
        %537 = vmatpush.msra.mxu0 0.0
        %538 = vmatpush.msra.mxu0 0.0
        %539 = vmatpush.msra.mxu0 0.0
        %540 = vmatpush.msra.mxu0 0.0
        %541 = vmatpush.msra.mxu0 0.0
        %542 = vmatpush.msra.mxu0 0.0
        %543 = vmatpush.msra.mxu0 0.0
        %544 = vmatpush.msra.mxu0 0.0
        %545 = vmatpush.msra.mxu0 0.0
        %546 = vmatpush.msra.mxu0 0.0
        %547 = vmatpush.msra.mxu0 %v404
        %548 = vmatpush.msra.mxu0 %v403
        %549 = vmatmul.f32.gmra.mxu0 %v528
        %v550 = vpop.f32.mrf.mxu0
        %v551 = vadd.f32 0.0, %v550
        %552 = vmatmul.f32.gmra.mxu0 %v531
        %v553 = vpop.f32.mrf.mxu0
        %v554 = vadd.f32 0.0, %v553
        %555 = vdwg.mxu0
        %v556 = vsub.f32 %v551, %v401
        %v557 = vsub.f32 %v554, %v402
        %v558 = vmul.f32 %v556, 0.5
        %v559 = vmul.f32 %v557, 0.5
        %v560 = vadd.f32 %v401, %v558
        %v561 = vadd.f32 %v402, %v559
        %562 = vst.msk [vmem:[%s393] sm:$0xff] %vm413, %v560
        %563 = vst.msk [vmem:[%s393 + $0x8] sm:$0xff] %vm413, %v561
        %564 = vst.msk [vmem:[%s400] sm:$0xff] %vm500, %v525
        %565 = vst.msk [vmem:[%s400 + $0x8] sm:$0xff] %vm500, %v526
        %s566 = sand.u32 %s176, 1
        %s567 = scalar_lea.sflag [#allocation4], %s566
        %s568 = sand.u32 %s176, 1
        %s569 = smul.addr %s568, 16
        %s570 = scalar_lea.vmem [#allocation11], %s569
        %s571 = sand.u32 %s202, 1
        %s572 = scalar_lea.sflag [#allocation13], %s571
        %s573 = sand.u32 %s202, 1
        %s574 = smul.addr %s573, 16
        %s575 = scalar_lea.vmem [#allocation12], %s574
        // Predicated region
        $region65: #{tpu_custom_call.1} parent=43 // pred_check
          %p576 = pneg %p186
        $region66: #{tpu_custom_call.1} parent=43 // pred_check_branch
          %578 = sbr.rel (%p576) target = $region68
        $region67: #{tpu_custom_call.1} parent=43 // pred_region
          %580 = vsyncadd %s567, 0
          %s581 = smul.addr %s32, 2
          %s582 = smul.addr %s581, 8
          %s583 = scalar_lea.hbm %s6, %s582
          %s584 = sshll.u32 %s570, 4
          %s585 = int_to_ptr.vmem [resolvable:$true] %s584
          %s586 = sshll.u32 %s583, 4
          %s587 = int_to_ptr.hbm [resolvable:$true] %s586
          %592 = dma.vmem_to_hbm [thread:$0]  %s585, 256, %s587, %s567, 128, 128, 8
        $region68: #{tpu_custom_call.1} parent=43 // pred_fallthru
          _
        // Predicated region
        $region69: #{tpu_custom_call.1} parent=43 // pred_check
          %p593 = pneg %p212
        $region70: #{tpu_custom_call.1} parent=43 // pred_check_branch
          %595 = sbr.rel (%p593) target = $region72
        $region71: #{tpu_custom_call.1} parent=43 // pred_region
          %597 = vsyncadd %s572, 0
          %s598 = smul.addr %s32, 2
          %s599 = smul.addr %s598, 8
          %s600 = scalar_lea.hbm %s7, %s599
          %s601 = sshll.u32 %s575, 4
          %s602 = int_to_ptr.vmem [resolvable:$true] %s601
          %s603 = sshll.u32 %s600, 4
          %s604 = int_to_ptr.hbm [resolvable:$true] %s603
          %609 = dma.vmem_to_hbm [thread:$0]  %s602, 256, %s604, %s572, 128, 128, 8
        $region72: #{tpu_custom_call.1} parent=43 // pred_fallthru
          _
      $region44: #{tpu_custom_call.1} parent=5 // pred_fallthru
        _
      %p610 = scmp.le.s32.totalorder 2, %s27
      // Predicated region
      $region73: #{tpu_custom_call.1} parent=5 // pred_check
        %p611 = pneg %p610
      $region74: #{tpu_custom_call.1} parent=5 // pred_check_branch
        %613 = sbr.rel (%p611) target = $region76
      $region75: #{tpu_custom_call.1} parent=5 // pred_region
        %s614 = ssub.s32 %s27, 2
        // Predicated region
        $region77: #{tpu_custom_call.1} parent=75 // pred_check
          %p615 = pneg %p192
        $region78: #{tpu_custom_call.1} parent=75 // pred_check_branch
          %617 = sbr.rel (%p615) target = $region80
        $region79: #{tpu_custom_call.1} parent=75 // pred_region
          %s618 = sand.u32 %s177, 1
          %s619 = scalar_lea.sflag [#allocation4], %s618
          %s620 = sand.u32 %s177, 1
          %s621 = smul.addr %s620, 16
          %s622 = scalar_lea.vmem [#allocation11], %s621
          %624 = dma.done %s619, 256
        $region80: #{tpu_custom_call.1} parent=75 // pred_fallthru
          _
        // Predicated region
        $region81: #{tpu_custom_call.1} parent=75 // pred_check
          %p625 = pneg %p218
        $region82: #{tpu_custom_call.1} parent=75 // pred_check_branch
          %627 = sbr.rel (%p625) target = $region84
        $region83: #{tpu_custom_call.1} parent=75 // pred_region
          %s628 = sand.u32 %s203, 1
          %s629 = scalar_lea.sflag [#allocation13], %s628
          %s630 = sand.u32 %s203, 1
          %s631 = smul.addr %s630, 16
          %s632 = scalar_lea.vmem [#allocation12], %s631
          %634 = dma.done %s629, 256
        $region84: #{tpu_custom_call.1} parent=75 // pred_fallthru
          _
      $region76: #{tpu_custom_call.1} parent=5 // pred_fallthru
        _
    $region6: #{tpu_custom_call.1} parent=1 // loop_footer
      %s31 = sadd.s32 1, %s27
    $region7: #{tpu_custom_call.1} parent=1 // loop_footer_branch
      %26 = sbr.rel target = $region3
    $region8: #{tpu_custom_call.1} parent=1 // loop_exit
      _
    %635 = vsyncpa [#allocation3], 1
    %s636 = scalar_lea.sflag [#allocation3], 1
    %637 = vsyncpa %s636, 1
    %638 = vsyncpa [#allocation6], 1
    %s639 = scalar_lea.sflag [#allocation6], 1
    %640 = vsyncpa %s639, 1
    %641 = vsyncpa [#allocation9], 1
    %642 = vsyncpa [#allocation4], 1
    %s643 = scalar_lea.sflag [#allocation4], 1
    %644 = vsyncpa %s643, 1
    %645 = vsyncpa [#allocation13], 1
    %s646 = scalar_lea.sflag [#allocation13], 1
    %647 = vsyncpa %s646, 1

</llo_original>
